<compile_context>
chip_gen: v5e
topology: v5e:2x2
jax: 0.10.0
libtpu: 0.0.40
codegen_flags: <defaults>
</compile_context>

<pallas_src>
import functools

import jax
import jax.numpy as jnp
from jax.experimental import pallas as pl
from jax.experimental.pallas import tpu as pltpu

_LANE = 128
_SUBLANE = 8


def _round_up(a, m):
    return (a + m - 1) // m * m


# --------------------------------------------------------------------------- #
# Kernel
# --------------------------------------------------------------------------- #
def _mlp_kernel(x_ref, w1_ref, c1_ref, w2_ref, c2_ref, w3_ref, b3_ref, o_ref):
    # c_fc1 + folded c_bn1 + c_relu1   (c_drop1 is identity in eval)
    x = x_ref[...].astype(jnp.bfloat16)   # no-op if x is already bf16
    h = jnp.dot(x, w1_ref[...], preferred_element_type=jnp.float32) + c1_ref[...]
    h = jnp.maximum(h, 0.0)

    # c_fc2 + folded c_bn2 + c_relu2
    h = jnp.dot(h.astype(jnp.bfloat16), w2_ref[...],
                preferred_element_type=jnp.float32) + c2_ref[...]
    h = jnp.maximum(h, 0.0)

    # c_fc3
    out = jnp.dot(h.astype(jnp.bfloat16), w3_ref[...],
                  preferred_element_type=jnp.float32) + b3_ref[...]
    o_ref[...] = out.astype(o_ref.dtype)


# --------------------------------------------------------------------------- #
# One-time parameter preparation (call once at model load, NOT per forward)
# --------------------------------------------------------------------------- #
def fold_and_pad_params(params):
    """Fold BN into the linears, zero-pad feature dims to 128, cast W to bf16.

    Returns a tuple of 6 arrays (w1p, c1p, w2p, c2p, w3p, b3p).  Padded lanes
    of the biases are zero and ReLU(0)==0, so padded hidden lanes stay exactly
    zero through the network and never leak into the real outputs.
    """
    (w1, b1, s1, t1, w2, b2, s2, t2, w3, b3) = params
    F, H = w1.shape
    C = w3.shape[1]
    Hp = _round_up(H, _LANE)
    Cp = _round_up(C, _LANE)

    # y = (x@W + b)*s + t  ==  x@(W*s) + (b*s + t)
    w1f, c1 = w1 * s1, b1 * s1 + t1
    w2f, c2 = w2 * s2, b2 * s2 + t2

    def pad2(a, rows, cols):
        return jnp.pad(a, ((0, rows - a.shape[0]), (0, cols - a.shape[1])))

    w1p = pad2(w1f, F, Hp).astype(jnp.bfloat16)
    c1p = pad2(c1, 1, Hp).astype(jnp.float32)
    w2p = pad2(w2f, Hp, Hp).astype(jnp.bfloat16)
    c2p = pad2(c2, 1, Hp).astype(jnp.float32)
    w3p = pad2(w3, Hp, Cp).astype(jnp.bfloat16)
    b3p = pad2(b3, 1, Cp).astype(jnp.float32)
    return (w1p, c1p, w2p, c2p, w3p, b3p)


# --------------------------------------------------------------------------- #
# Forward (jitted: pad + pallas_call + slice fuse into one dispatch)
# --------------------------------------------------------------------------- #
@functools.partial(jax.jit, static_argnames=("num_classes", "batch_tile", "out_dtype"))
def label_classifier_forward(x, folded_params, *, num_classes,
                             batch_tile=1024, out_dtype=jnp.bfloat16):
    """x: [B, num_ftrs] f32 or bf16.  Returns logits [B, num_classes]."""
    w1p, c1p, w2p, c2p, w3p, b3p = folded_params
    B, F = x.shape
    Hp = w1p.shape[1]
    Cp = w3p.shape[1]

    # Single grid step whenever the batch fits in one tile (no forced split:
    # v5e/v6e have one TensorCore and the extra step is pure overhead).
    # batch_tile is a multiple of 256, so large batches tile cleanly for the
    # 2x256^2 MXU and still give v7x's two cores multiple "parallel" steps.
    tile = min(batch_tile, _round_up(B, _SUBLANE))
    Bp = _round_up(B, tile)
    if Bp != B:
        x = jnp.pad(x, ((0, Bp - B), (0, 0)))
    grid = (Bp // tile,)

    row = lambda i: (i, 0)    # x / out: tile over batch
    full = lambda i: (0, 0)   # weights / biases: constant block, stays resident

    out = pl.pallas_call(
        _mlp_kernel,
        out_shape=jax.ShapeDtypeStruct((Bp, Cp), out_dtype),
        grid_spec=pltpu.PrefetchScalarGridSpec(
            num_scalar_prefetch=0,
            grid=grid,
            in_specs=[
                pl.BlockSpec((tile, F), row),   # x
                pl.BlockSpec((F, Hp), full),    # W1 * bn1.scale   (bf16)
                pl.BlockSpec((1, Hp), full),    # b1*s1 + t1        (f32)
                pl.BlockSpec((Hp, Hp), full),   # W2 * bn2.scale   (bf16)
                pl.BlockSpec((1, Hp), full),    # b2*s2 + t2        (f32)
                pl.BlockSpec((Hp, Cp), full),   # W3               (bf16)
                pl.BlockSpec((1, Cp), full),    # b3                (f32)
            ],
            out_specs=pl.BlockSpec((tile, Cp), row),
        ),
        compiler_params=pltpu.CompilerParams(
            dimension_semantics=("parallel",),
            vmem_limit_bytes=32 * 1024 * 1024,
        ),
    )(x, w1p, c1p, w2p, c2p, w3p, b3p)

    # Inside jit, this slice fuses with the consumer (no extra HBM pass).
    return out[:B, :num_classes]


# --------------------------------------------------------------------------- #
# Parameter init + references (for the self-test)
# --------------------------------------------------------------------------- #
def init_params(key, num_ftrs, num_classes, hidden=100, eps=1e-5):
    """Deterministic synthetic parameters matching the PyTorch module's shapes.

    Linear weights stored as [in, out] (transposed vs torch).  BatchNorm1d is
    represented as an eval-mode (scale, shift) pair.
    """
    ks = jax.random.split(key, 6)

    def linear(kw, kb, fan_in, fan_out):
        bound = 1.0 / jnp.sqrt(fan_in)
        w = jax.random.uniform(kw, (fan_in, fan_out), jnp.float32, -bound, bound)
        b = jax.random.uniform(kb, (1, fan_out), jnp.float32, -bound, bound)
        return w, b

    w1, b1 = linear(ks[0], ks[1], num_ftrs, hidden)
    w2, b2 = linear(ks[2], ks[3], hidden, hidden)
    w3, b3 = linear(ks[4], ks[5], hidden, num_classes)

    def bn_fold(n):
        gamma = jnp.ones((1, n), jnp.float32)   # torch default BN init
        beta = jnp.zeros((1, n), jnp.float32)
        running_mean = jnp.zeros((1, n), jnp.float32)
        running_var = jnp.ones((1, n), jnp.float32)
        scale = gamma / jnp.sqrt(running_var + eps)
        shift = beta - running_mean * scale
        return scale, shift

    s1, t1 = bn_fold(hidden)
    s2, t2 = bn_fold(hidden)
    return (w1, b1, s1, t1, w2, b2, s2, t2, w3, b3)


def _reference_f32(x, params):
    (w1, b1, s1, t1, w2, b2, s2, t2, w3, b3) = params
    h = jnp.maximum((x @ w1 + b1) * s1 + t1, 0.0)
    h = jnp.maximum((h @ w2 + b2) * s2 + t2, 0.0)
    return h @ w3 + b3


def _reference_matched(x, params):
    """Same math the kernel performs (folded BN, bf16 dot inputs, f32 accum)."""
    (w1, b1, s1, t1, w2, b2, s2, t2, w3, b3) = params

    def mm(a, w):
        return jnp.dot(a.astype(jnp.bfloat16), w.astype(jnp.bfloat16),
                       preferred_element_type=jnp.float32)

    h = jnp.maximum(mm(x, w1 * s1) + (b1 * s1 + t1), 0.0)
    h = jnp.maximum(mm(h, w2 * s2) + (b2 * s2 + t2), 0.0)
    return mm(h, w3) + b3


if __name__ == "__main__":
    num_ftrs = 32
    num_classes = 10
    batch = 32

    key = jax.random.PRNGKey(0)
    kx, kp = jax.random.split(key)
    x = jax.random.normal(kx, (batch, num_ftrs), jnp.float32)
    params = init_params(kp, num_ftrs, num_classes)

    # One-time model-load step (hoisted out of the per-call path).
    folded = jax.tree_util.tree_map(jax.block_until_ready,
                                    fold_and_pad_params(params))

    fwd = functools.partial(label_classifier_forward, num_classes=num_classes)

    # Default (bf16 logits) path.
    out_bf16 = jax.block_until_ready(fwd(x, folded))
    assert out_bf16.shape == (batch, num_classes)
    assert out_bf16.dtype == jnp.bfloat16

    # Exact-dtype (f32 logits) path.
    out_f32 = jax.block_until_ready(fwd(x, folded, out_dtype=jnp.float32))
    assert out_f32.shape == (batch, num_classes)
    assert out_f32.dtype == jnp.float32

    ref_bf16 = _reference_matched(x, params)
    ref_f32 = _reference_f32(x, params)

    assert jnp.allclose(out_f32, ref_bf16, atol=1e-3, rtol=1e-3), \
        "mismatch vs bf16-matched reference (f32 output path)"
    assert jnp.allclose(out_bf16.astype(jnp.float32), ref_bf16,
                        atol=3e-2, rtol=2e-2), \
        "mismatch vs bf16-matched reference (bf16 output path)"
    assert jnp.allclose(out_f32, ref_f32, atol=5e-2, rtol=5e-2), \
        "mismatch vs f32 reference"

    # Ragged batch: exercises batch padding + fused output slicing.
    x2 = x[:13]
    out2 = jax.block_until_ready(fwd(x2, folded, out_dtype=jnp.float32))
    assert out2.shape == (13, num_classes)
    assert jnp.allclose(out2, ref_bf16[:13], atol=1e-3, rtol=1e-3)

    # bf16 activations are accepted directly (no extra wrapper cast).
    out3 = jax.block_until_ready(fwd(x.astype(jnp.bfloat16), folded,
                                     out_dtype=jnp.float32))
    assert jnp.allclose(out3, ref_bf16, atol=3e-2, rtol=2e-2)

    print("KERNEL_OK")
</pallas_src>

<mosaic_0001>
module attributes {stable_mosaic.version = 11 : i64} {
  func.func @_mlp_kernel(%arg0: i32, %arg1: memref<32x32xf32, #tpu.memory_space<vmem>>, %arg2: memref<32x128xbf16, #tpu.memory_space<vmem>>, %arg3: memref<1x128xf32, #tpu.memory_space<vmem>>, %arg4: memref<128x128xbf16, #tpu.memory_space<vmem>>, %arg5: memref<1x128xf32, #tpu.memory_space<vmem>>, %arg6: memref<128x128xbf16, #tpu.memory_space<vmem>>, %arg7: memref<1x128xf32, #tpu.memory_space<vmem>>, %arg8: memref<32x128xbf16, #tpu.memory_space<vmem>>) attributes {dimension_semantics = [#tpu.dimension_semantics<parallel>], iteration_bounds = array<i64: 1>, scalar_prefetch = 0 : i64, scratch_operands = 0 : i64, tpu.core_type = #tpu.core_type<tc>, window_params = [{transform_indices = @transform_0, window_bounds = array<i64: 32, 32>}, {pipeline_mode = #tpu.pipeline_mode<synchronous>, transform_indices = @transform_1, window_bounds = array<i64: 32, 128>}, {pipeline_mode = #tpu.pipeline_mode<synchronous>, transform_indices = @transform_2, window_bounds = array<i64: 1, 128>}, {pipeline_mode = #tpu.pipeline_mode<synchronous>, transform_indices = @transform_3, window_bounds = array<i64: 128, 128>}, {pipeline_mode = #tpu.pipeline_mode<synchronous>, transform_indices = @transform_4, window_bounds = array<i64: 1, 128>}, {pipeline_mode = #tpu.pipeline_mode<synchronous>, transform_indices = @transform_5, window_bounds = array<i64: 128, 128>}, {pipeline_mode = #tpu.pipeline_mode<synchronous>, transform_indices = @transform_6, window_bounds = array<i64: 1, 128>}, {transform_indices = @transform_7, window_bounds = array<i64: 32, 128>}]} {
    %c0 = arith.constant 0 : index
    %c0_0 = arith.constant 0 : index
    %0 = vector.load %arg1[%c0, %c0_0] : memref<32x32xf32, #tpu.memory_space<vmem>>, vector<32x32xf32>
    %1 = arith.truncf %0 : vector<32x32xf32> to vector<32x32xbf16>
    %c0_1 = arith.constant 0 : index
    %c0_2 = arith.constant 0 : index
    %2 = vector.load %arg2[%c0_1, %c0_2] : memref<32x128xbf16, #tpu.memory_space<vmem>>, vector<32x128xbf16>
    %cst = arith.constant dense<0.000000e+00> : vector<32x128xf32>
    %3 = tpu.matmul %1, %2, %cst {dimension_numbers = #tpu.dot_dimension_numbers<[1], [0], [0], [1], [0, 0, 1, 1], [], []>} : vector<32x32xbf16>, vector<32x128xbf16>, vector<32x128xf32> -> vector<32x128xf32>
    %c0_3 = arith.constant 0 : index
    %c0_4 = arith.constant 0 : index
    %4 = vector.load %arg3[%c0_3, %c0_4] : memref<1x128xf32, #tpu.memory_space<vmem>>, vector<1x128xf32>
    %5 = vector.broadcast %4 : vector<1x128xf32> to vector<32x128xf32>
    %6 = arith.addf %3, %5 : vector<32x128xf32>
    %cst_5 = arith.constant 0.000000e+00 : f32
    %7 = vector.broadcast %cst_5 : f32 to vector<32x128xf32>
    %8 = arith.maximumf %6, %7 : vector<32x128xf32>
    %9 = arith.truncf %8 : vector<32x128xf32> to vector<32x128xbf16>
    %c0_6 = arith.constant 0 : index
    %c0_7 = arith.constant 0 : index
    %10 = vector.load %arg4[%c0_6, %c0_7] : memref<128x128xbf16, #tpu.memory_space<vmem>>, vector<128x128xbf16>
    %cst_8 = arith.constant dense<0.000000e+00> : vector<32x128xf32>
    %11 = tpu.matmul %9, %10, %cst_8 {dimension_numbers = #tpu.dot_dimension_numbers<[1], [0], [0], [1], [0, 0, 1, 1], [], []>} : vector<32x128xbf16>, vector<128x128xbf16>, vector<32x128xf32> -> vector<32x128xf32>
    %c0_9 = arith.constant 0 : index
    %c0_10 = arith.constant 0 : index
    %12 = vector.load %arg5[%c0_9, %c0_10] : memref<1x128xf32, #tpu.memory_space<vmem>>, vector<1x128xf32>
    %13 = vector.broadcast %12 : vector<1x128xf32> to vector<32x128xf32>
    %14 = arith.addf %11, %13 : vector<32x128xf32>
    %cst_11 = arith.constant 0.000000e+00 : f32
    %15 = vector.broadcast %cst_11 : f32 to vector<32x128xf32>
    %16 = arith.maximumf %14, %15 : vector<32x128xf32>
    %17 = arith.truncf %16 : vector<32x128xf32> to vector<32x128xbf16>
    %c0_12 = arith.constant 0 : index
    %c0_13 = arith.constant 0 : index
    %18 = vector.load %arg6[%c0_12, %c0_13] : memref<128x128xbf16, #tpu.memory_space<vmem>>, vector<128x128xbf16>
    %cst_14 = arith.constant dense<0.000000e+00> : vector<32x128xf32>
    %19 = tpu.matmul %17, %18, %cst_14 {dimension_numbers = #tpu.dot_dimension_numbers<[1], [0], [0], [1], [0, 0, 1, 1], [], []>} : vector<32x128xbf16>, vector<128x128xbf16>, vector<32x128xf32> -> vector<32x128xf32>
    %c0_15 = arith.constant 0 : index
    %c0_16 = arith.constant 0 : index
    %20 = vector.load %arg7[%c0_15, %c0_16] : memref<1x128xf32, #tpu.memory_space<vmem>>, vector<1x128xf32>
    %21 = vector.broadcast %20 : vector<1x128xf32> to vector<32x128xf32>
    %22 = arith.addf %19, %21 : vector<32x128xf32>
    %23 = arith.truncf %22 : vector<32x128xf32> to vector<32x128xbf16>
    %c0_17 = arith.constant 0 : index
    %c0_18 = arith.constant 0 : index
    %24 = vector.load %arg8[%c0_17, %c0_18] : memref<32x128xbf16, #tpu.memory_space<vmem>>, vector<32x128xbf16>
    tpu.vector_store %arg8[%c0_17, %c0_18], %23 {strides = array<i32>} : memref<32x128xbf16, #tpu.memory_space<vmem>>, vector<32x128xbf16>,
    return
  }
  func.func @transform_0(%arg0: i32) -> (i32, i32) {
    %c0_i32 = arith.constant 0 : i32
    %c0_i32_0 = arith.constant 0 : i32
    return %arg0, %c0_i32 : i32, i32
  }
  func.func @transform_1(%arg0: i32) -> (i32, i32) {
    %c0_i32 = arith.constant 0 : i32
    %c0_i32_0 = arith.constant 0 : i32
    %c0_i32_1 = arith.constant 0 : i32
    return %c0_i32, %c0_i32_0 : i32, i32
  }
  func.func @transform_2(%arg0: i32) -> (i32, i32) {
    %c0_i32 = arith.constant 0 : i32
    %c0_i32_0 = arith.constant 0 : i32
    %c0_i32_1 = arith.constant 0 : i32
    return %c0_i32, %c0_i32_0 : i32, i32
  }
  func.func @transform_3(%arg0: i32) -> (i32, i32) {
    %c0_i32 = arith.constant 0 : i32
    %c0_i32_0 = arith.constant 0 : i32
    %c0_i32_1 = arith.constant 0 : i32
    return %c0_i32, %c0_i32_0 : i32, i32
  }
  func.func @transform_4(%arg0: i32) -> (i32, i32) {
    %c0_i32 = arith.constant 0 : i32
    %c0_i32_0 = arith.constant 0 : i32
    %c0_i32_1 = arith.constant 0 : i32
    return %c0_i32, %c0_i32_0 : i32, i32
  }
  func.func @transform_5(%arg0: i32) -> (i32, i32) {
    %c0_i32 = arith.constant 0 : i32
    %c0_i32_0 = arith.constant 0 : i32
    %c0_i32_1 = arith.constant 0 : i32
    return %c0_i32, %c0_i32_0 : i32, i32
  }
  func.func @transform_6(%arg0: i32) -> (i32, i32) {
    %c0_i32 = arith.constant 0 : i32
    %c0_i32_0 = arith.constant 0 : i32
    %c0_i32_1 = arith.constant 0 : i32
    return %c0_i32, %c0_i32_0 : i32, i32
  }
  func.func @transform_7(%arg0: i32) -> (i32, i32) {
    %c0_i32 = arith.constant 0 : i32
    %c0_i32_0 = arith.constant 0 : i32
    return %arg0, %c0_i32 : i32, i32
  }
}

</mosaic_0001>

<llo_original>
// kernel: label_classifier_forward.1
$region0: #{label_classifier_forward.1}
  #allocation0 [shape = 'u32[]', space=smem, size = 0x4, offset = 0x4, fixed_abs, tag = 'smem constant byte address 0x4 - core index']
  #allocation1 [shape = 'u32[72,128]{1,0:T(1,128)}', space=vmem, size = 0x9000, scoped, tag = 'internal scratch']
  %s0 = inlined_call_operand.hbm [shape: f32[32,32], index: 0, kind: input, shape index: {}]
  %s1 = inlined_call_operand.hbm [shape: bf16[32,128], index: 1, kind: input, shape index: {}]
  %s2 = inlined_call_operand.vmem [shape: f32[1,128], index: 2, kind: input, shape index: {}]
  %s3 = inlined_call_operand.hbm [shape: bf16[128,128], index: 3, kind: input, shape index: {}]
  %s4 = inlined_call_operand.vmem [shape: f32[1,128], index: 4, kind: input, shape index: {}]
  %s5 = inlined_call_operand.hbm [shape: bf16[128,128], index: 5, kind: input, shape index: {}]
  %s6 = inlined_call_operand.vmem [shape: f32[1,128], index: 6, kind: input, shape index: {}]
  %s7 = inlined_call_operand.vmem [shape: bf16[32,128], index: 7, kind: output, shape index: {}]
  %s8 = sld [smem:[#allocation0]]
  $region54: #{label_classifier_forward.1} parent=0
    _
  %s10 = ssub.s32 1, %s8
  %s11 = scalar_select 0, %s10, %s8
  $region1: #{label_classifier_forward.1} parent=0
    #allocation2 [shape = 'u8[16384]{0}', space=vmem, size = 0x4000, scoped, tag = 'input window, operand 0, single buffered']
    #allocation3 [shape = 's32[1]{0}', space=sflag, size = 0x4, scoped, tag = 'scoped memory for label_classifier_forward.1']
    #allocation4 [shape = 'u8[8192]{0}', space=vmem, size = 0x2000, scoped, tag = 'input window, operand 1, single buffered']
    #allocation5 [shape = 's32[1]{0}', space=sflag, size = 0x4, scoped, tag = 'scoped memory for label_classifier_forward.1']
    #allocation6 [shape = 'u8[32768]{0}', space=vmem, size = 0x8000, scoped, tag = 'input window, operand 3, single buffered']
    #allocation7 [shape = 'u8[32768]{0}', space=vmem, size = 0x8000, scoped, tag = 'input window, operand 5, single buffered']
    #allocation8 [shape = 's32[1]{0}', space=sflag, size = 0x4, scoped, tag = 'scoped memory for label_classifier_forward.1']
    %12 = vsyncpa [#allocation3], 0
    %13 = vsyncpa [#allocation5], 0
    %14 = vsyncpa [#allocation8], 0
    // Predicated region
    $region2: #{label_classifier_forward.1} parent=1 // pred_check
      _
    $region3: #{label_classifier_forward.1} parent=1 // pred_check_branch
      %16 = sbr.rel (0) target = $region5
    $region4: #{label_classifier_forward.1} parent=1 // pred_region
      %18 = vsyncadd [#allocation3], 0
      %s19 = sshll.u32 %s0, 4
      %s20 = int_to_ptr.hbm [resolvable:$true] %s19
      %s21 = sshll.u32 [#allocation2], 4
      %s22 = int_to_ptr.vmem [resolvable:$true] %s21
      %27 = dma.hbm_to_vmem [thread:$0]  %s20, 512, %s22, [#allocation3], 128, 128, 8
    $region5: #{label_classifier_forward.1} parent=1 // pred_fallthru
      _
    // Predicated region
    $region6: #{label_classifier_forward.1} parent=1 // pred_check
      _
    $region7: #{label_classifier_forward.1} parent=1 // pred_check_branch
      %29 = sbr.rel (0) target = $region9
    $region8: #{label_classifier_forward.1} parent=1 // pred_region
      %31 = vsyncadd [#allocation5], 0
      %s32 = sshll.u32 %s1, 4
      %s33 = int_to_ptr.hbm [resolvable:$true] %s32
      %s34 = sshll.u32 [#allocation4], 4
      %s35 = int_to_ptr.vmem [resolvable:$true] %s34
      %40 = dma.hbm_to_vmem [thread:$0]  %s33, 256, %s35, [#allocation5], 64, 64, 4
    $region9: #{label_classifier_forward.1} parent=1 // pred_fallthru
      _
    // Predicated region
    $region10: #{label_classifier_forward.1} parent=1 // pred_check
      _
    $region11: #{label_classifier_forward.1} parent=1 // pred_check_branch
      %42 = sbr.rel (0) target = $region13
    $region12: #{label_classifier_forward.1} parent=1 // pred_region
      _
    $region13: #{label_classifier_forward.1} parent=1 // pred_fallthru
      _
    // Predicated region
    $region14: #{label_classifier_forward.1} parent=1 // pred_check
      _
    $region15: #{label_classifier_forward.1} parent=1 // pred_check_branch
      %44 = sbr.rel (0) target = $region17
    $region16: #{label_classifier_forward.1} parent=1 // pred_region
      %46 = vsyncadd [#allocation5], 0
      %s47 = sshll.u32 %s3, 4
      %s48 = int_to_ptr.hbm [resolvable:$true] %s47
      %s49 = sshll.u32 [#allocation6], 4
      %s50 = int_to_ptr.vmem [resolvable:$true] %s49
      %55 = dma.hbm_to_vmem [thread:$0]  %s48, 1024, %s50, [#allocation5], 64, 64, 4
    $region17: #{label_classifier_forward.1} parent=1 // pred_fallthru
      _
    // Predicated region
    $region18: #{label_classifier_forward.1} parent=1 // pred_check
      _
    $region19: #{label_classifier_forward.1} parent=1 // pred_check_branch
      %57 = sbr.rel (0) target = $region21
    $region20: #{label_classifier_forward.1} parent=1 // pred_region
      _
    $region21: #{label_classifier_forward.1} parent=1 // pred_fallthru
      _
    // Predicated region
    $region22: #{label_classifier_forward.1} parent=1 // pred_check
      _
    $region23: #{label_classifier_forward.1} parent=1 // pred_check_branch
      %59 = sbr.rel (0) target = $region25
    $region24: #{label_classifier_forward.1} parent=1 // pred_region
      %61 = vsyncadd [#allocation8], 0
      %s62 = sshll.u32 %s5, 4
      %s63 = int_to_ptr.hbm [resolvable:$true] %s62
      %s64 = sshll.u32 [#allocation7], 4
      %s65 = int_to_ptr.vmem [resolvable:$true] %s64
      %70 = dma.hbm_to_vmem [thread:$0]  %s63, 1024, %s65, [#allocation8], 64, 64, 4
    $region25: #{label_classifier_forward.1} parent=1 // pred_fallthru
      _
    // Predicated region
    $region26: #{label_classifier_forward.1} parent=1 // pred_check
      _
    $region27: #{label_classifier_forward.1} parent=1 // pred_check_branch
      %72 = sbr.rel (0) target = $region29
    $region28: #{label_classifier_forward.1} parent=1 // pred_region
      _
    $region29: #{label_classifier_forward.1} parent=1 // pred_fallthru
      _
    // Predicated region
    $region30: #{label_classifier_forward.1} parent=1 // pred_check
      _
    $region31: #{label_classifier_forward.1} parent=1 // pred_check_branch
      %74 = sbr.rel (0) target = $region33
    $region32: #{label_classifier_forward.1} parent=1 // pred_region
      %76 = dma.done [#allocation3], 512
    $region33: #{label_classifier_forward.1} parent=1 // pred_fallthru
      _
    // Predicated region
    $region34: #{label_classifier_forward.1} parent=1 // pred_check
      _
    $region35: #{label_classifier_forward.1} parent=1 // pred_check_branch
      %78 = sbr.rel (0) target = $region37
    $region36: #{label_classifier_forward.1} parent=1 // pred_region
      %80 = dma.done [#allocation5], 256
    $region37: #{label_classifier_forward.1} parent=1 // pred_fallthru
      _
    // Predicated region
    $region38: #{label_classifier_forward.1} parent=1 // pred_check
      _
    $region39: #{label_classifier_forward.1} parent=1 // pred_check_branch
      %82 = sbr.rel (0) target = $region41
    $region40: #{label_classifier_forward.1} parent=1 // pred_region
      %84 = dma.done [#allocation5], 1024
    $region41: #{label_classifier_forward.1} parent=1 // pred_fallthru
      _
    // Predicated region
    $region42: #{label_classifier_forward.1} parent=1 // pred_check
      _
    $region43: #{label_classifier_forward.1} parent=1 // pred_check_branch
      %86 = sbr.rel (0) target = $region45
    $region44: #{label_classifier_forward.1} parent=1 // pred_region
      %88 = dma.done [#allocation8], 1024
    $region45: #{label_classifier_forward.1} parent=1 // pred_fallthru
      _
    %v90 = vld [vmem:[#allocation2] sm:$0xff]
    %v91 = vld [vmem:[#allocation2 + $0x8] sm:$0xff]
    %v92 = vld [vmem:[#allocation2 + $0x10] sm:$0xff]
    %v93 = vld [vmem:[#allocation2 + $0x18] sm:$0xff]
    %v94 = vpack.c.bf16 %v91, %v90
    %v95 = vpack.c.bf16 %v93, %v92
    %v96 = vld [vmem:[#allocation4] sm:$0xf]
    %v97 = vld [vmem:[#allocation4 + $0x4] sm:$0xf]
    %v98 = vld [vmem:[#allocation4 + $0x8] sm:$0xf]
    %v99 = vld [vmem:[#allocation4 + $0xc] sm:$0xf]
    %v100 = vld [vmem:[%s2] sm:$0x1]
    %v102 = vperm.slane %v100, 0
    %v108 = vunpack.c.l.b16 %v96
    %v109 = vunpack.c.l.b16 %v97
    %v110 = vunpack.c.l.b16 %v98
    %v111 = vunpack.c.l.b16 %v99
    %v112 = vpack.c.b16 %v109, %v108
    %v113 = vpack.c.b16 %v111, %v110
    %vm116 = vcmask 261120
    %v118 = vsel %vm116, %v94, 0
    %v121 = vsel %vm116, %v95, 0
    %123 = vmatpush.bf16.msra.mxu0 0
    %124 = vmatpush.bf16.msra.mxu0 0
    %125 = vmatpush.bf16.msra.mxu0 0
    %126 = vmatpush.bf16.msra.mxu0 0
    %127 = vmatpush.bf16.msra.mxu0 0
    %128 = vmatpush.bf16.msra.mxu0 0
    %129 = vmatpush.bf16.msra.mxu0 %v113
    %130 = vmatpush.bf16.msra.mxu0 %v112
    %131 = vmatmul.bf16.gmra.mxu0 %v118
    %v132 = vpop.f32.mrf.mxu0
    %v133 = vadd.f32 %v102, %v132
    %v134 = vpop.f32.mrf.mxu0
    %v135 = vadd.f32 %v102, %v134
    %136 = vmatmul.bf16.gmra.mxu0 %v121
    %v137 = vpop.f32.mrf.mxu0
    %v138 = vadd.f32 %v102, %v137
    %v139 = vpop.f32.mrf.mxu0
    %v140 = vadd.f32 %v102, %v139
    %141 = vdwg.mxu0
    %v142 = vmax.f32 %v133, 0.0
    %v143 = vmax.f32 %v135, 0.0
    %v144 = vmax.f32 %v138, 0.0
    %v145 = vmax.f32 %v140, 0.0
    %v146 = vpack.c.bf16 %v143, %v142
    %v147 = vpack.c.bf16 %v145, %v144
    %v148 = vld [vmem:[#allocation6] sm:$0xf]
    %v149 = vld [vmem:[#allocation6 + $0x4] sm:$0xf]
    %v150 = vld [vmem:[#allocation6 + $0x8] sm:$0xf]
    %v151 = vld [vmem:[#allocation6 + $0xc] sm:$0xf]
    %v152 = vld [vmem:[#allocation6 + $0x10] sm:$0xf]
    %v153 = vld [vmem:[#allocation6 + $0x14] sm:$0xf]
    %v154 = vld [vmem:[#allocation6 + $0x18] sm:$0xf]
    %v155 = vld [vmem:[#allocation6 + $0x1c] sm:$0xf]
    %v156 = vld [vmem:[#allocation6 + $0x20] sm:$0xf]
    %v157 = vld [vmem:[#allocation6 + $0x24] sm:$0xf]
    %v158 = vld [vmem:[#allocation6 + $0x28] sm:$0xf]
    %v159 = vld [vmem:[#allocation6 + $0x2c] sm:$0xf]
    %v160 = vld [vmem:[#allocation6 + $0x30] sm:$0xf]
    %v161 = vld [vmem:[#allocation6 + $0x34] sm:$0xf]
    %v162 = vld [vmem:[#allocation6 + $0x38] sm:$0xf]
    %v163 = vld [vmem:[#allocation6 + $0x3c] sm:$0xf]
    %v164 = vld [vmem:[%s4] sm:$0x1]
    %v166 = vperm.slane %v164, 0
    %v184 = vunpack.c.l.b16 %v148
    %v185 = vunpack.c.l.b16 %v149
    %v186 = vunpack.c.l.b16 %v150
    %v187 = vunpack.c.l.b16 %v151
    %v188 = vunpack.c.l.b16 %v152
    %v189 = vunpack.c.l.b16 %v153
    %v190 = vunpack.c.l.b16 %v154
    %v191 = vunpack.c.l.b16 %v155
    %v192 = vunpack.c.l.b16 %v156
    %v193 = vunpack.c.l.b16 %v157
    %v194 = vunpack.c.l.b16 %v158
    %v195 = vunpack.c.l.b16 %v159
    %v196 = vunpack.c.l.b16 %v160
    %v197 = vunpack.c.l.b16 %v161
    %v198 = vunpack.c.l.b16 %v162
    %v199 = vunpack.c.l.b16 %v163
    %v200 = vpack.c.b16 %v185, %v184
    %v201 = vpack.c.b16 %v187, %v186
    %v202 = vpack.c.b16 %v189, %v188
    %v203 = vpack.c.b16 %v191, %v190
    %v204 = vpack.c.b16 %v193, %v192
    %v205 = vpack.c.b16 %v195, %v194
    %v206 = vpack.c.b16 %v197, %v196
    %v207 = vpack.c.b16 %v199, %v198
    %216 = vmatpush.bf16.msra.mxu0 %v207
    %217 = vmatpush.bf16.msra.mxu0 %v206
    %218 = vmatpush.bf16.msra.mxu0 %v205
    %219 = vmatpush.bf16.msra.mxu0 %v204
    %220 = vmatpush.bf16.msra.mxu0 %v203
    %221 = vmatpush.bf16.msra.mxu0 %v202
    %222 = vmatpush.bf16.msra.mxu0 %v201
    %223 = vmatpush.bf16.msra.mxu0 %v200
    %224 = vmatmul.bf16.gmra.mxu0 %v146
    %v225 = vpop.f32.mrf.mxu0
    %v226 = vadd.f32 %v166, %v225
    %v227 = vpop.f32.mrf.mxu0
    %v228 = vadd.f32 %v166, %v227
    %229 = vmatmul.bf16.gmra.mxu0 %v147
    %v230 = vpop.f32.mrf.mxu0
    %v231 = vadd.f32 %v166, %v230
    %v232 = vpop.f32.mrf.mxu0
    %v233 = vadd.f32 %v166, %v232
    %234 = vdwg.mxu0
    %v235 = vmax.f32 %v226, 0.0
    %v236 = vmax.f32 %v228, 0.0
    %v237 = vmax.f32 %v231, 0.0
    %v238 = vmax.f32 %v233, 0.0
    %v239 = vpack.c.bf16 %v236, %v235
    %v240 = vpack.c.bf16 %v238, %v237
    %v241 = vld [vmem:[#allocation7] sm:$0xf]
    %v242 = vld [vmem:[#allocation7 + $0x4] sm:$0xf]
    %v243 = vld [vmem:[#allocation7 + $0x8] sm:$0xf]
    %v244 = vld [vmem:[#allocation7 + $0xc] sm:$0xf]
    %v245 = vld [vmem:[#allocation7 + $0x10] sm:$0xf]
    %v246 = vld [vmem:[#allocation7 + $0x14] sm:$0xf]
    %v247 = vld [vmem:[#allocation7 + $0x18] sm:$0xf]
    %v248 = vld [vmem:[#allocation7 + $0x1c] sm:$0xf]
    %v249 = vld [vmem:[#allocation7 + $0x20] sm:$0xf]
    %v250 = vld [vmem:[#allocation7 + $0x24] sm:$0xf]
    %v251 = vld [vmem:[#allocation7 + $0x28] sm:$0xf]
    %v252 = vld [vmem:[#allocation7 + $0x2c] sm:$0xf]
    %v253 = vld [vmem:[#allocation7 + $0x30] sm:$0xf]
    %v254 = vld [vmem:[#allocation7 + $0x34] sm:$0xf]
    %v255 = vld [vmem:[#allocation7 + $0x38] sm:$0xf]
    %v256 = vld [vmem:[#allocation7 + $0x3c] sm:$0xf]
    %v257 = vld [vmem:[%s6] sm:$0x1]
    %v259 = vperm.slane %v257, 0
    %v277 = vunpack.c.l.b16 %v241
    %v278 = vunpack.c.l.b16 %v242
    %v279 = vunpack.c.l.b16 %v243
    %v280 = vunpack.c.l.b16 %v244
    %v281 = vunpack.c.l.b16 %v245
    %v282 = vunpack.c.l.b16 %v246
    %v283 = vunpack.c.l.b16 %v247
    %v284 = vunpack.c.l.b16 %v248
    %v285 = vunpack.c.l.b16 %v249
    %v286 = vunpack.c.l.b16 %v250
    %v287 = vunpack.c.l.b16 %v251
    %v288 = vunpack.c.l.b16 %v252
    %v289 = vunpack.c.l.b16 %v253
    %v290 = vunpack.c.l.b16 %v254
    %v291 = vunpack.c.l.b16 %v255
    %v292 = vunpack.c.l.b16 %v256
    %v293 = vpack.c.b16 %v278, %v277
    %v294 = vpack.c.b16 %v280, %v279
    %v295 = vpack.c.b16 %v282, %v281
    %v296 = vpack.c.b16 %v284, %v283
    %v297 = vpack.c.b16 %v286, %v285
    %v298 = vpack.c.b16 %v288, %v287
    %v299 = vpack.c.b16 %v290, %v289
    %v300 = vpack.c.b16 %v292, %v291
    %309 = vmatpush.bf16.msra.mxu0 %v300
    %310 = vmatpush.bf16.msra.mxu0 %v299
    %311 = vmatpush.bf16.msra.mxu0 %v298
    %312 = vmatpush.bf16.msra.mxu0 %v297
    %313 = vmatpush.bf16.msra.mxu0 %v296
    %314 = vmatpush.bf16.msra.mxu0 %v295
    %315 = vmatpush.bf16.msra.mxu0 %v294
    %316 = vmatpush.bf16.msra.mxu0 %v293
    %317 = vmatmul.bf16.gmra.mxu0 %v239
    %v318 = vpop.f32.mrf.mxu0
    %v319 = vadd.f32 %v259, %v318
    %v320 = vpop.f32.mrf.mxu0
    %v321 = vadd.f32 %v259, %v320
    %322 = vmatmul.bf16.gmra.mxu0 %v240
    %v323 = vpop.f32.mrf.mxu0
    %v324 = vadd.f32 %v259, %v323
    %v325 = vpop.f32.mrf.mxu0
    %v326 = vadd.f32 %v259, %v325
    %327 = vdwg.mxu0
    %v328 = vpack.c.bf16 %v319, %v319
    %v329 = vpack.c.bf16 %v321, %v321
    %v330 = vpack.c.bf16 %v324, %v324
    %v331 = vpack.c.bf16 %v326, %v326
    %332 = vst [vmem:[%s7] sm:$0xf] %v328
    %333 = vst [vmem:[%s7 + $0x4] sm:$0xf] %v329
    %334 = vst [vmem:[%s7 + $0x8] sm:$0xf] %v330
    %335 = vst [vmem:[%s7 + $0xc] sm:$0xf] %v331
    // Predicated region
    $region46: #{label_classifier_forward.1} parent=1 // pred_check
      _
    $region47: #{label_classifier_forward.1} parent=1 // pred_check_branch
      %337 = sbr.rel (0) target = $region49
    $region48: #{label_classifier_forward.1} parent=1 // pred_region
      _
    $region49: #{label_classifier_forward.1} parent=1 // pred_fallthru
      _
    // Predicated region
    $region50: #{label_classifier_forward.1} parent=1 // pred_check
      _
    $region51: #{label_classifier_forward.1} parent=1 // pred_check_branch
      %339 = sbr.rel (0) target = $region53
    $region52: #{label_classifier_forward.1} parent=1 // pred_region
      _
    $region53: #{label_classifier_forward.1} parent=1 // pred_fallthru
      _
    %340 = vsyncpa [#allocation3], 1
    %341 = vsyncpa [#allocation5], 1
    %342 = vsyncpa [#allocation8], 1

</llo_original>
